<compile_context>
chip_gen: v7x
topology: tpu7x:2x2x1
jax: 0.10.0
libtpu: 0.0.40
codegen_flags: <defaults>
</compile_context>

<pallas_src>
import math
import functools

import jax
import jax.numpy as jnp
from jax.experimental import pallas as pl
from jax.experimental.pallas import tpu as pltpu


# ---------------------------------------------------------------------------
# Kernels
# ---------------------------------------------------------------------------
def _k1_bias_kernel(x_ref, w_ref, b_ref, o_ref):
    # K not tiled: single dot, direct write, no accumulator round-trip.
    acc = jnp.dot(x_ref[...], w_ref[...], preferred_element_type=jnp.float32)
    o_ref[...] = (acc + b_ref[...].astype(jnp.float32)).astype(o_ref.dtype)


def _k1_nobias_kernel(x_ref, w_ref, o_ref):
    o_ref[...] = jnp.dot(
        x_ref[...], w_ref[...], preferred_element_type=jnp.float32
    ).astype(o_ref.dtype)


def _acc_bias_kernel(x_ref, w_ref, b_ref, o_ref, acc_ref):
    @pl.when(pl.program_id(2) == 0)
    def _():
        acc_ref[...] = jnp.zeros_like(acc_ref)

    acc_ref[...] += jnp.dot(x_ref[...], w_ref[...],
                            preferred_element_type=jnp.float32)

    @pl.when(pl.program_id(2) == pl.num_programs(2) - 1)
    def _():
        o_ref[...] = (acc_ref[...] + b_ref[...].astype(jnp.float32)
                      ).astype(o_ref.dtype)


def _acc_nobias_kernel(x_ref, w_ref, o_ref, acc_ref):
    @pl.when(pl.program_id(2) == 0)
    def _():
        acc_ref[...] = jnp.zeros_like(acc_ref)

    acc_ref[...] += jnp.dot(x_ref[...], w_ref[...],
                            preferred_element_type=jnp.float32)

    @pl.when(pl.program_id(2) == pl.num_programs(2) - 1)
    def _():
        o_ref[...] = acc_ref[...].astype(o_ref.dtype)


# ---------------------------------------------------------------------------
# Wrapper
# ---------------------------------------------------------------------------
def _round_up(a, b):
    return (a + b - 1) // b * b


def linear_norm_forward(x, weight, bias=None, *, compute_dtype=None,
                        tm_max=512, tn_max=512, tk_max=2048,
                        weight_resident_bytes=4 * 1024 * 1024,
                        vmem_limit_bytes=48 * 1024 * 1024):
    """y = x @ weight.T + bias   (torch.nn.Linear / Tacotron2 LinearNorm).

    x:      (..., in_dim)
    weight: (out_dim, in_dim)  -- PyTorch layout
    bias:   (out_dim,) or None
    compute_dtype: optionally cast x/weight (e.g. jnp.bfloat16) before the
        matmul; accumulation stays f32 and the output keeps x's dtype.
    """
    *lead, in_dim = x.shape
    out_dim, in_dim_w = weight.shape
    assert in_dim_w == in_dim, "weight must be (out_dim, in_dim)"
    m = int(math.prod(lead)) if lead else 1
    out_dtype = x.dtype

    if compute_dtype is not None:
        x = x.astype(compute_dtype)
        weight = weight.astype(compute_dtype)

    x2d = x.reshape(m, in_dim)
    # One-time (K, N) layout for the MXU RHS; constant-folds under jit for
    # fixed weights and avoids any per-tile transpose inside the kernel.
    w_t = weight.T

    x_item = jnp.dtype(x2d.dtype).itemsize
    w_item = jnp.dtype(w_t.dtype).itemsize
    o_item = jnp.dtype(out_dtype).itemsize

    # ---- K axis: tile only when in_dim is very wide.  Explicit zero-pad is
    # kept ONLY here (required for reduction correctness with ragged K).
    tk_max = max(128, (tk_max // 128) * 128)
    if in_dim <= tk_max:
        tk, k_grid = in_dim, 1
    else:
        tk = tk_max
        k_pad = _round_up(in_dim, tk)
        k_grid = k_pad // tk
        x2d = jnp.pad(x2d, ((0, 0), (0, k_pad - in_dim)))
        w_t = jnp.pad(w_t, ((0, k_pad - in_dim), (0, 0)))

    # ---- N axis: keep the whole weight VMEM-resident for typical Tacotron2
    # sizes (N grid collapses to 1 -> weight fetched from HBM exactly once).
    resident = (k_grid == 1 and out_dim * in_dim * w_item <= weight_resident_bytes)
    if resident or out_dim <= tn_max:
        tn = out_dim                       # == full dim, always a legal block
    else:
        tn = max(128, (tn_max // 128) * 128)
    n_grid = pl.cdiv(out_dim, tn)

    # ---- M axis: no padding; ragged last block handled by Pallas masking
    # (garbage rows only feed output rows that are never written).
    tm = min(tm_max, _round_up(m, 8))
    if pl.cdiv(m, tm) * n_grid < 2 and m > 8:
        # give the "parallel" axes >=2 blocks so both TensorCores get work
        tm = _round_up(pl.cdiv(m, 2), 8)

    # ---- shrink tiles until the double-buffered working set fits VMEM budget
    def vmem_est(tm_, tn_):
        e = (2 * tm_ * tk * x_item          # x blocks (double buffered)
             + 2 * tk * tn_ * w_item        # weight blocks
             + 2 * tm_ * tn_ * o_item       # output blocks
             + 2 * tn_ * 4)                 # bias block
        if k_grid > 1:
            e += tm_ * tn_ * 4              # f32 accumulator scratch
        return e

    budget = int(0.6 * vmem_limit_bytes)
    while vmem_est(tm, tn) > budget and tm > 8:
        tm = max(8, _round_up(tm // 2, 8))
    while vmem_est(tm, tn) > budget and tn > 128:
        tn = max(128, (tn // 2) // 128 * 128)

    m_grid = pl.cdiv(m, tm)
    n_grid = pl.cdiv(out_dim, tn)
    grid = (m_grid, n_grid, k_grid)

    x_spec = pl.BlockSpec((tm, tk), lambda i, j, k: (i, k))
    w_spec = pl.BlockSpec((tk, tn), lambda i, j, k: (k, j))
    b_spec = pl.BlockSpec((1, tn), lambda i, j, k: (0, j))
    o_spec = pl.BlockSpec((tm, tn), lambda i, j, k: (i, j))

    # Cost estimate reflecting the actual re-fetch factors of this grid order.
    x_bytes = x2d.size * x_item
    w_bytes = w_t.size * w_item
    o_bytes = m * out_dim * o_item
    w_refetch = 1 if (n_grid == 1 and k_grid == 1) else m_grid
    cost = pl.CostEstimate(
        flops=2 * m * in_dim * out_dim,
        transcendentals=0,
        bytes_accessed=x_bytes * n_grid + w_bytes * w_refetch + o_bytes,
    )
    compiler_params = pltpu.CompilerParams(
        dimension_semantics=("parallel", "parallel", "arbitrary"),
        vmem_limit_bytes=vmem_limit_bytes,
    )
    out_shape = jax.ShapeDtypeStruct((m, out_dim), out_dtype)
    scratch = [] if k_grid == 1 else [pltpu.VMEM((tm, tn), jnp.float32)]

    if bias is not None:
        b2d = bias.reshape(1, out_dim).astype(jnp.float32)
        kernel = _k1_bias_kernel if k_grid == 1 else _acc_bias_kernel
        in_specs = [x_spec, w_spec, b_spec]
        args = (x2d, w_t, b2d)
    else:
        kernel = _k1_nobias_kernel if k_grid == 1 else _acc_nobias_kernel
        in_specs = [x_spec, w_spec]
        args = (x2d, w_t)

    y2d = pl.pallas_call(
        kernel,
        out_shape=out_shape,
        grid_spec=pltpu.PrefetchScalarGridSpec(
            num_scalar_prefetch=0,
            grid=grid,
            in_specs=in_specs,
            out_specs=o_spec,
            scratch_shapes=scratch,
        ),
        compiler_params=compiler_params,
        cost_estimate=cost,
    )(*args)

    return y2d.reshape(*lead, out_dim)


# ---------------------------------------------------------------------------
# Parameter init matching LinearNorm.__init__ semantics
# ---------------------------------------------------------------------------
def init_linear_norm_params(key, in_dim, out_dim, bias=True, w_init_gain="linear"):
    """weight: xavier_uniform_ with calculate_gain(w_init_gain) (1.0 for 'linear');
    bias: PyTorch Linear default uniform(-1/sqrt(in_dim), 1/sqrt(in_dim))."""
    gain = 1.0  # torch.nn.init.calculate_gain('linear') == 1.0
    k_w, k_b = jax.random.split(key)
    bound_w = gain * math.sqrt(6.0 / (in_dim + out_dim))
    weight = jax.random.uniform(
        k_w, (out_dim, in_dim), jnp.float32, minval=-bound_w, maxval=bound_w)
    if bias:
        bound_b = 1.0 / math.sqrt(in_dim)
        b = jax.random.uniform(
            k_b, (out_dim,), jnp.float32, minval=-bound_b, maxval=bound_b)
    else:
        b = None
    return weight, b


if __name__ == "__main__":
    key = jax.random.PRNGKey(0)
    k_x, k_p, k_x3, k_p3 = jax.random.split(key, 4)

    # --- main path: small Tacotron2-like shapes, K untiled, weight resident
    batch, seq, in_dim, out_dim = 2, 8, 32, 64
    x = jax.random.normal(k_x, (batch, seq, in_dim), dtype=jnp.float32)
    weight, bias = init_linear_norm_params(k_p, in_dim, out_dim, bias=True,
                                           w_init_gain="linear")

    fwd = jax.jit(linear_norm_forward)
    y = jax.block_until_ready(fwd(x, weight, bias))
    y_ref = jnp.dot(x, weight.T, precision=jax.lax.Precision.HIGHEST) + bias
    assert y.shape == (batch, seq, out_dim)
    assert jnp.allclose(y, y_ref, atol=1e-3, rtol=1e-3)

    # --- no-bias path
    y_nb = jax.block_until_ready(fwd(x, weight, None))
    y_nb_ref = jnp.dot(x, weight.T, precision=jax.lax.Precision.HIGHEST)
    assert jnp.allclose(y_nb, y_nb_ref, atol=1e-3, rtol=1e-3)

    # --- bf16 compute path (f32 accumulation), looser tolerance
    fwd_bf16 = jax.jit(functools.partial(linear_norm_forward,
                                         compute_dtype=jnp.bfloat16))
    y_bf = jax.block_until_ready(fwd_bf16(x, weight, bias))
    assert jnp.allclose(y_bf, y_ref, atol=5e-2, rtol=5e-2)

    # --- K-tiled (accumulator) path: force tk_max small so in_dim > tk_max
    in_dim3, out_dim3, m3 = 200, 96, 4
    x3 = jax.random.normal(k_x3, (m3, in_dim3), dtype=jnp.float32)
    w3, b3 = init_linear_norm_params(k_p3, in_dim3, out_dim3, bias=True)
    fwd_kt = jax.jit(functools.partial(linear_norm_forward, tk_max=128))
    y3 = jax.block_until_ready(fwd_kt(x3, w3, b3))
    y3_ref = jnp.dot(x3, w3.T, precision=jax.lax.Precision.HIGHEST) + b3
    assert y3.shape == (m3, out_dim3)
    assert jnp.allclose(y3, y3_ref, atol=1e-3, rtol=1e-3)

    print("KERNEL_OK")
</pallas_src>

<mosaic_0001>
module attributes {stable_mosaic.version = 11 : i64} {
  func.func @_k1_bias_kernel(%arg0: i32, %arg1: i32, %arg2: i32, %arg3: memref<8x32xf32, #tpu.memory_space<vmem>>, %arg4: memref<32x64xf32, #tpu.memory_space<vmem>>, %arg5: memref<1x64xf32, #tpu.memory_space<vmem>>, %arg6: memref<8x64xf32, #tpu.memory_space<vmem>>) attributes {dimension_semantics = [#tpu.dimension_semantics<parallel>, #tpu.dimension_semantics<parallel>, #tpu.dimension_semantics<arbitrary>], iteration_bounds = array<i64: 2, 1, 1>, scalar_prefetch = 0 : i64, scratch_operands = 0 : i64, tpu.core_type = #tpu.core_type<tc>, window_params = [{transform_indices = @transform_0, window_bounds = array<i64: 8, 32>}, {transform_indices = @transform_1, window_bounds = array<i64: 32, 64>}, {transform_indices = @transform_2, window_bounds = array<i64: 1, 64>}, {transform_indices = @transform_3, window_bounds = array<i64: 8, 64>}]} {
    %c0 = arith.constant 0 : index
    %c0_0 = arith.constant 0 : index
    %0 = vector.load %arg3[%c0, %c0_0] : memref<8x32xf32, #tpu.memory_space<vmem>>, vector<8x32xf32>
    %c0_1 = arith.constant 0 : index
    %c0_2 = arith.constant 0 : index
    %1 = vector.load %arg4[%c0_1, %c0_2] : memref<32x64xf32, #tpu.memory_space<vmem>>, vector<32x64xf32>
    %cst = arith.constant dense<0.000000e+00> : vector<8x64xf32>
    %2 = tpu.matmul %0, %1, %cst {dimension_numbers = #tpu.dot_dimension_numbers<[1], [0], [0], [1], [0, 0, 1, 1], [], []>} : vector<8x32xf32>, vector<32x64xf32>, vector<8x64xf32> -> vector<8x64xf32>
    %c0_3 = arith.constant 0 : index
    %c0_4 = arith.constant 0 : index
    %3 = vector.load %arg5[%c0_3, %c0_4] : memref<1x64xf32, #tpu.memory_space<vmem>>, vector<1x64xf32>
    %4 = vector.broadcast %3 : vector<1x64xf32> to vector<8x64xf32>
    %5 = arith.addf %2, %4 : vector<8x64xf32>
    %c0_5 = arith.constant 0 : index
    %c0_6 = arith.constant 0 : index
    %6 = vector.load %arg6[%c0_5, %c0_6] : memref<8x64xf32, #tpu.memory_space<vmem>>, vector<8x64xf32>
    tpu.vector_store %arg6[%c0_5, %c0_6], %5 {strides = array<i32>} : memref<8x64xf32, #tpu.memory_space<vmem>>, vector<8x64xf32>,
    return
  }
  func.func @transform_0(%arg0: i32, %arg1: i32, %arg2: i32) -> (i32, i32) {
    %c0_i32 = arith.constant 0 : i32
    return %arg0, %arg2 : i32, i32
  }
  func.func @transform_1(%arg0: i32, %arg1: i32, %arg2: i32) -> (i32, i32) {
    %c0_i32 = arith.constant 0 : i32
    return %arg2, %arg1 : i32, i32
  }
  func.func @transform_2(%arg0: i32, %arg1: i32, %arg2: i32) -> (i32, i32) {
    %c0_i32 = arith.constant 0 : i32
    %c0_i32_0 = arith.constant 0 : i32
    return %c0_i32, %arg1 : i32, i32
  }
  func.func @transform_3(%arg0: i32, %arg1: i32, %arg2: i32) -> (i32, i32) {
    %c0_i32 = arith.constant 0 : i32
    return %arg0, %arg1 : i32, i32
  }
}

</mosaic_0001>

<llo_original>
// kernel: linear_norm_forward.1
$region0: #{linear_norm_forward.1}
  #allocation0 [shape = 'u32[]', space=smem, size = 0x4, offset = 0x4, fixed_abs, tag = 'smem constant byte address 0x4 - core index']
  #allocation1 [shape = 'u32[144,128]{1,0:T(1,128)}', space=vmem, size = 0x12000, scoped, tag = 'internal scratch']
  %s0 = inlined_call_operand.hbm [shape: f32[16,32], index: 0, kind: input, shape index: {}]
  %s1 = inlined_call_operand.hbm [shape: f32[32,64], index: 1, kind: input, shape index: {}]
  %s2 = inlined_call_operand.vmem [shape: f32[1,64], index: 2, kind: input, shape index: {}]
  %s3 = inlined_call_operand.hbm [shape: f32[16,64], index: 3, kind: output, shape index: {}]
  %s4 = sld [smem:[#allocation0]]
  $region53: #{linear_norm_forward.1} parent=0
    _
  %s6 = ssub.s32 1, %s4
  %s7 = scalar_select 0, %s6, %s4
  $region1: #{linear_norm_forward.1} parent=0
    #allocation2 [shape = 'u8[8192]{0}', space=vmem, size = 0x2000, scoped, tag = 'input window, operand 0']
    #allocation3 [shape = 's32[2]{0}', space=sflag, size = 0x8, scoped, tag = 'scoped memory for linear_norm_forward.1']
    #allocation4 [shape = 's32[2]{0}', space=sflag, size = 0x8, scoped, tag = 'scoped memory for linear_norm_forward.1']
    #allocation5 [shape = 'u8[16384]{0}', space=vmem, size = 0x4000, scoped, tag = 'input window, operand 1, single buffered']
    #allocation6 [shape = 's32[1]{0}', space=sflag, size = 0x4, scoped, tag = 'scoped memory for linear_norm_forward.1']
    #allocation7 [shape = 'u8[8192]{0}', space=vmem, size = 0x2000, scoped, tag = 'output window, operand 0']
    %8 = vsyncpa [#allocation3], 0
    %s9 = scalar_lea.sflag [#allocation3], 1
    %10 = vsyncpa %s9, 0
    %11 = vsyncpa [#allocation6], 0
    %12 = vsyncpa [#allocation4], 0
    %s13 = scalar_lea.sflag [#allocation4], 1
    %14 = vsyncpa %s13, 0
    loop: start=0, step=1, limit=4
    $region2: #{linear_norm_forward.1} parent=1 // loop_pre_header
      _
    $region3: #{linear_norm_forward.1} parent=1 // loop_header
      %s16 = sphi 0, %s20
      %p17 = scmp.ge.s32.totalorder %s16, 4
      %s23 = sphi 0, %s42
      %s24 = sphi 0, %s38
      %s25 = sphi 0, %s34
      %s26 = sphi 0, %s23
      %s27 = sphi 0, %s24
      %s28 = sphi 0, %s25
      %s29 = sphi 0, %s26
      %s30 = sphi 0, %s27
      %s31 = sphi 0, %s28
      %s47 = sphi 0, %s49
      %s50 = sphi 0, %s47
      %s51 = sphi 0, %s50
      %s67 = sphi 0, %s51
      %s75 = sphi 0, %s77
      %s78 = sphi 0, %s75
      %s79 = sphi 0, %s78
      %s95 = sphi 0, %s79
      %s101 = sphi 0, %s103
      %s104 = sphi 0, %s101
      %s105 = sphi 0, %s104
      %s121 = sphi 0, %s105
      %s129 = sphi 0, %s131
      %s132 = sphi 0, %s129
      %s133 = sphi 0, %s132
      %s149 = sphi 0, %s133
    $region4: #{linear_norm_forward.1} parent=1 // loop_header_branch
      %19 = sbr.rel (%p17) target = $region8
    $region5: #{linear_norm_forward.1} parent=1 // loop_body
      %s21 = ssub.s32 %s16, 1
      %s22 = ssub.s32 %s16, 2
      %s32 = sadd.s32 1, %s25
      %p33 = scmp.ge.s32.totalorder %s32, 1
      %s34 = scalar_select %p33, 0, %s32
      %s35 = sadd.s32 1, %s24
      %s36 = scalar_select %p33, %s35, %s24
      %p37 = scmp.ge.s32.totalorder %s36, 1
      %s38 = scalar_select %p37, 0, %s36
      %s39 = sadd.s32 1, %s23
      %s40 = scalar_select %p37, %s39, %s23
      %p41 = scmp.ge.s32.totalorder %s40, 2
      %s42 = scalar_select %p41, 0, %s40
      %s43 = ssub.s32 %s23, %s42
      %s44 = ssub.s32 %s25, %s34
      %s45 = sor.u32 %s43, %s44
      %p46 = scmp.eq.s32.totalorder %s45, 0
      %s48 = sadd.s32 %s47, 1
      %s49 = scalar_select %p46, %s47, %s48
      %p52 = pneg %p46
      %p53 = scmp.eq.s32.totalorder %s16, 1
      %p54 = por %p52, %p53
      %p55 = scmp.ne.s32.totalorder %s47, %s50
      %p56 = scmp.eq.s32.totalorder %s16, 0
      %p57 = por %p55, %p56
      %p58 = scmp.ne.s32.totalorder %s47, %s50
      %p59 = scmp.eq.s32.totalorder %s21, 1
      %p60 = por %p58, %p59
      %p61 = scmp.ne.s32.totalorder %s50, %s51
      %p62 = scmp.eq.s32.totalorder %s21, 0
      %p63 = por %p61, %p62
      %p64 = scmp.ne.s32.totalorder %s50, %s51
      %p65 = scmp.eq.s32.totalorder %s22, 1
      %p66 = por %p64, %p65
      %p68 = scmp.ne.s32.totalorder %s51, %s67
      %p69 = scmp.eq.s32.totalorder %s22, 0
      %p70 = por %p68, %p69
      %s71 = ssub.s32 %s25, %s34
      %s72 = ssub.s32 %s24, %s38
      %s73 = sor.u32 %s71, %s72
      %p74 = scmp.eq.s32.totalorder %s73, 0
      %s76 = sadd.s32 %s75, 1
      %s77 = scalar_select %p74, %s75, %s76
      %p80 = pneg %p74
      %p81 = scmp.eq.s32.totalorder %s16, 1
      %p82 = por %p80, %p81
      %p83 = scmp.ne.s32.totalorder %s75, %s78
      %p84 = scmp.eq.s32.totalorder %s16, 0
      %p85 = por %p83, %p84
      %p86 = scmp.ne.s32.totalorder %s75, %s78
      %p87 = scmp.eq.s32.totalorder %s21, 1
      %p88 = por %p86, %p87
      %p89 = scmp.ne.s32.totalorder %s78, %s79
      %p90 = scmp.eq.s32.totalorder %s21, 0
      %p91 = por %p89, %p90
      %p92 = scmp.ne.s32.totalorder %s78, %s79
      %p93 = scmp.eq.s32.totalorder %s22, 1
      %p94 = por %p92, %p93
      %p96 = scmp.ne.s32.totalorder %s79, %s95
      %p97 = scmp.eq.s32.totalorder %s22, 0
      %p98 = por %p96, %p97
      %s99 = ssub.s32 %s24, %s38
      %p100 = scmp.eq.s32.totalorder %s99, 0
      %s102 = sadd.s32 %s101, 1
      %s103 = scalar_select %p100, %s101, %s102
      %p106 = pneg %p100
      %p107 = scmp.eq.s32.totalorder %s16, 1
      %p108 = por %p106, %p107
      %p109 = scmp.ne.s32.totalorder %s101, %s104
      %p110 = scmp.eq.s32.totalorder %s16, 0
      %p111 = por %p109, %p110
      %p112 = scmp.ne.s32.totalorder %s101, %s104
      %p113 = scmp.eq.s32.totalorder %s21, 1
      %p114 = por %p112, %p113
      %p115 = scmp.ne.s32.totalorder %s104, %s105
      %p116 = scmp.eq.s32.totalorder %s21, 0
      %p117 = por %p115, %p116
      %p118 = scmp.ne.s32.totalorder %s104, %s105
      %p119 = scmp.eq.s32.totalorder %s22, 1
      %p120 = por %p118, %p119
      %p122 = scmp.ne.s32.totalorder %s105, %s121
      %p123 = scmp.eq.s32.totalorder %s22, 0
      %p124 = por %p122, %p123
      %s125 = ssub.s32 %s23, %s42
      %s126 = ssub.s32 %s24, %s38
      %s127 = sor.u32 %s125, %s126
      %p128 = scmp.eq.s32.totalorder %s127, 0
      %s130 = sadd.s32 %s129, 1
      %s131 = scalar_select %p128, %s129, %s130
      %p134 = pneg %p128
      %p135 = scmp.eq.s32.totalorder %s16, 1
      %p136 = por %p134, %p135
      %p137 = scmp.ne.s32.totalorder %s129, %s132
      %p138 = scmp.eq.s32.totalorder %s16, 0
      %p139 = por %p137, %p138
      %p140 = scmp.ne.s32.totalorder %s129, %s132
      %p141 = scmp.eq.s32.totalorder %s21, 1
      %p142 = por %p140, %p141
      %p143 = scmp.ne.s32.totalorder %s132, %s133
      %p144 = scmp.eq.s32.totalorder %s21, 0
      %p145 = por %p143, %p144
      %p146 = scmp.ne.s32.totalorder %s132, %s133
      %p147 = scmp.eq.s32.totalorder %s22, 1
      %p148 = por %p146, %p147
      %p150 = scmp.ne.s32.totalorder %s133, %s149
      %p151 = scmp.eq.s32.totalorder %s22, 0
      %p152 = por %p150, %p151
      %p153 = scmp.le.s32.totalorder 1, %s16
      %p154 = scmp.lt.s32.totalorder %s16, 3
      %p155 = pnand %p153, %p154
      %p156 = pneg %p155
      // Predicated region
      $region9: #{linear_norm_forward.1} parent=5 // pred_check
        _
      $region10: #{linear_norm_forward.1} parent=5 // pred_check_branch
        %158 = sbr.rel (%p155) target = $region12
      $region11: #{linear_norm_forward.1} parent=5 // pred_region
        %s159 = ssub.s32 %s16, 1
        // Predicated region
        $region13: #{linear_norm_forward.1} parent=11 // pred_check
          %p160 = pneg %p91
        $region14: #{linear_norm_forward.1} parent=11 // pred_check_branch
          %162 = sbr.rel (%p160) target = $region16
        $region15: #{linear_norm_forward.1} parent=11 // pred_region
          %s163 = smul.u32 4, %s28
          %s165 = ssub.s32 512, 512
          %166 = vsyncadd [#allocation6], %s165
          %s167 = sadd.s32 %s27, %s163
          %s168 = smul.addr %s167, 128
          %s169 = scalar_lea.hbm %s1, %s168
          %s170 = sshll.u32 [#allocation5], 4
          %s171 = int_to_ptr.vmem [resolvable:$true] %s170
          %176 = dma.hbm_to_vmem [thread:$0]  %s169, 512, %s171, [#allocation6], 128, 128, 8
        $region16: #{linear_norm_forward.1} parent=11 // pred_fallthru
          _
        // Predicated region
        $region17: #{linear_norm_forward.1} parent=11 // pred_check
          %p177 = pneg %p117
        $region18: #{linear_norm_forward.1} parent=11 // pred_check_branch
          %179 = sbr.rel (%p177) target = $region20
        $region19: #{linear_norm_forward.1} parent=11 // pred_region
          %p180 = scmp.lt.s32.totalorder %s27, 0
          %s181 = scalar_select %p180, %s27, 0
          %s182 = scalar_lea.vmem %s2, %s181
        $region20: #{linear_norm_forward.1} parent=11 // pred_fallthru
          _
      $region12: #{linear_norm_forward.1} parent=5 // pred_fallthru
        _
      %p183 = scmp.lt.s32.totalorder %s16, 2
      // Predicated region
      $region21: #{linear_norm_forward.1} parent=5 // pred_check
        %p184 = pneg %p183
      $region22: #{linear_norm_forward.1} parent=5 // pred_check_branch
        %186 = sbr.rel (%p184) target = $region24
      $region23: #{linear_norm_forward.1} parent=5 // pred_region
        // Predicated region
        $region25: #{linear_norm_forward.1} parent=23 // pred_check
          %p187 = pneg %p57
        $region26: #{linear_norm_forward.1} parent=23 // pred_check_branch
          %189 = sbr.rel (%p187) target = $region28
        $region27: #{linear_norm_forward.1} parent=23 // pred_region
          %s190 = sand.u32 %s47, 1
          %s191 = scalar_lea.sflag [#allocation3], %s190
          %s192 = sand.u32 %s47, 1
          %s193 = smul.addr %s192, 8
          %s194 = scalar_lea.vmem [#allocation2], %s193
          %s196 = ssub.s32 128, 128
          %197 = vsyncadd %s191, %s196
          %s198 = sadd.s32 %s25, %s23
          %s199 = smul.addr %s198, 128
          %s200 = scalar_lea.hbm %s0, %s199
          %s202 = sshll.u32 %s194, 4
          %s203 = int_to_ptr.vmem [resolvable:$true] %s202
          %205 = dma.hbm_to_vmem [thread:$0]  %s200, 128, %s203, %s191
        $region28: #{linear_norm_forward.1} parent=23 // pred_fallthru
          _
      $region24: #{linear_norm_forward.1} parent=5 // pred_fallthru
        _
      %p206 = scmp.le.s32.totalorder 1, %s16
      %p207 = scmp.lt.s32.totalorder %s16, 3
      %p208 = pnand %p206, %p207
      %p209 = pneg %p208
      // Predicated region
      $region29: #{linear_norm_forward.1} parent=5 // pred_check
        _
      $region30: #{linear_norm_forward.1} parent=5 // pred_check_branch
        %211 = sbr.rel (%p208) target = $region32
      $region31: #{linear_norm_forward.1} parent=5 // pred_region
        %s212 = ssub.s32 %s16, 1
        %s213 = sand.u32 %s50, 1
        %s214 = scalar_lea.sflag [#allocation3], %s213
        %s215 = sand.u32 %s50, 1
        %s216 = smul.addr %s215, 8
        %s217 = scalar_lea.vmem [#allocation2], %s216
        // Predicated region
        $region33: #{linear_norm_forward.1} parent=31 // pred_check
          %p218 = pneg %p63
        $region34: #{linear_norm_forward.1} parent=31 // pred_check_branch
          %220 = sbr.rel (%p218) target = $region36
        $region35: #{linear_norm_forward.1} parent=31 // pred_region
          %221 = dma.done %s214, 128
        $region36: #{linear_norm_forward.1} parent=31 // pred_fallthru
          _
        // Predicated region
        $region37: #{linear_norm_forward.1} parent=31 // pred_check
          %p222 = pneg %p91
        $region38: #{linear_norm_forward.1} parent=31 // pred_check_branch
          %224 = sbr.rel (%p222) target = $region40
        $region39: #{linear_norm_forward.1} parent=31 // pred_region
          %225 = dma.done [#allocation6], 512
        $region40: #{linear_norm_forward.1} parent=31 // pred_fallthru
          _
        %s226 = sand.u32 %s50, 1
        %s227 = scalar_lea.sflag [#allocation3], %s226
        %s228 = sand.u32 %s50, 1
        %s229 = smul.addr %s228, 8
        %s230 = scalar_lea.vmem [#allocation2], %s229
        %p231 = pneg %p63
        %p232 = pneg %p60
        %p233 = pneg %p91
        %p234 = pneg %p88
        %p235 = scmp.lt.s32.totalorder %s27, 0
        %s236 = scalar_select %p235, %s27, 0
        %s237 = scalar_lea.vmem %s2, %s236
        %p238 = pneg %p117
        %p239 = pneg %p114
        %p240 = pneg %p145
        %p241 = pneg %p142
        %s242 = sand.u32 %s132, 1
        %s243 = scalar_lea.sflag [#allocation4], %s242
        %s244 = sand.u32 %s132, 1
        %s245 = smul.addr %s244, 8
        %s246 = scalar_lea.vmem [#allocation7], %s245
        %s247 = smul.u32 4, %s28
        %p248 = scmp.lt.s32.totalorder %s27, 0
        %s249 = scalar_select %p248, %s27, 0
        %s250 = scalar_lea.vmem %s2, %s249
        %v251 = vld [vmem:[%s217] sm:$0xff]
        %v252 = vld [vmem:[#allocation5] sm:$0xff]
        %v253 = vld [vmem:[#allocation5 + $0x8] sm:$0xff]
        %v254 = vld [vmem:[#allocation5 + $0x10] sm:$0xff]
        %v255 = vld [vmem:[#allocation5 + $0x18] sm:$0xff]
        %v256 = vld [vmem:[%s250] sm:$0x1]
        %v258 = vlaneseq
        %v259 = vshrl.u32 %v258, 7
        %v260 = vsub.s32 0, %v259
        %v261 = vrot.slane %v256, %v260
        %vm263 = vcmask 261120
        %v265 = vsel %vm263, %v251, 0
        %267 = vmatprep.subr.mxu0 0.0
        %268 = vmatpush1.msra.mxu0 %v252
        %269 = vmatprep.subr.mxu0 0.0
        %270 = vmatpush1.msra.mxu0 %v253
        %271 = vmatprep.subr.mxu0 0.0
        %272 = vmatpush1.msra.mxu0 %v254
        %273 = vmatprep.subr.mxu0 0.0
        %274 = vmatpush1.msra.mxu0 %v255
        %275 = vmatprep.subr.mxu0 0.0
        %276 = vmatpush1.msra.mxu0 0.0
        %277 = vmatprep.subr.mxu0 0.0
        %278 = vmatpush1.msra.mxu0 0.0
        %279 = vmatprep.subr.mxu0 0.0
        %280 = vmatpush1.msra.mxu0 0.0
        %281 = vmatprep.subr.mxu0 0.0
        %282 = vmatpush1.msra.mxu0 0.0
        %283 = vmatprep.subr.mxu0 0.0
        %284 = vmatpush1.msra.mxu0 0.0
        %285 = vmatprep.subr.mxu0 0.0
        %286 = vmatpush1.msra.mxu0 0.0
        %287 = vmatprep.subr.mxu0 0.0
        %288 = vmatpush1.msra.mxu0 0.0
        %289 = vmatprep.subr.mxu0 0.0
        %290 = vmatpush1.msra.mxu0 0.0
        %291 = vmatprep.subr.mxu0 0.0
        %292 = vmatpush1.msra.mxu0 0.0
        %293 = vmatprep.subr.mxu0 0.0
        %294 = vmatpush1.msra.mxu0 0.0
        %295 = vmatprep.subr.mxu0 0.0
        %296 = vmatpush1.msra.mxu0 0.0
        %297 = vmatprep.subr.mxu0 0.0
        %298 = vmatpush1.msra.mxu0 0.0
        %299 = vmatprep.subr.mxu0 0.0
        %300 = vmatpush1.msra.mxu0 0.0
        %301 = vmatprep.subr.mxu0 0.0
        %302 = vmatpush1.msra.mxu0 0.0
        %303 = vmatprep.subr.mxu0 0.0
        %304 = vmatpush1.msra.mxu0 0.0
        %305 = vmatprep.subr.mxu0 0.0
        %306 = vmatpush1.msra.mxu0 0.0
        %307 = vmatprep.subr.mxu0 0.0
        %308 = vmatpush1.msra.mxu0 0.0
        %309 = vmatprep.subr.mxu0 0.0
        %310 = vmatpush1.msra.mxu0 0.0
        %311 = vmatprep.subr.mxu0 0.0
        %312 = vmatpush1.msra.mxu0 0.0
        %313 = vmatprep.subr.mxu0 0.0
        %314 = vmatpush1.msra.mxu0 0.0
        %315 = vmatprep.subr.mxu0 0.0
        %316 = vmatpush1.msra.mxu0 0.0
        %317 = vmatprep.subr.mxu0 0.0
        %318 = vmatpush1.msra.mxu0 0.0
        %319 = vmatprep.subr.mxu0 0.0
        %320 = vmatpush1.msra.mxu0 0.0
        %321 = vmatprep.subr.mxu0 0.0
        %322 = vmatpush1.msra.mxu0 0.0
        %323 = vmatprep.subr.mxu0 0.0
        %324 = vmatpush1.msra.mxu0 0.0
        %325 = vmatprep.subr.mxu0 0.0
        %326 = vmatpush1.msra.mxu0 0.0
        %327 = vmatprep.subr.mxu0 0.0
        %328 = vmatpush1.msra.mxu0 0.0
        %329 = vmatprep.subr.mxu0 0.0
        %330 = vmatpush1.msra.mxu0 0.0
        %331 = vmatprep.mubr.f32.mxu0 0.0
        %332 = vmatmul.mubr.f32.gmra.mrb[0].mxu0 %v265
        %v333 = vpop.f32.mrb[0].mxu0
        %v334 = vadd.f32 %v261, %v333
        %v335 = vpop.f32.mrb[0].mxu0
        %336 = vdwg.mxu0
        %vm337 = vcmask 523264
        %338 = vst.msk [vmem:[%s246] sm:$0xff] %vm337, %v334
        %s339 = sand.u32 %s132, 1
        %s340 = scalar_lea.sflag [#allocation4], %s339
        %s341 = sand.u32 %s132, 1
        %s342 = smul.addr %s341, 8
        %s343 = scalar_lea.vmem [#allocation7], %s342
        // Predicated region
        $region41: #{linear_norm_forward.1} parent=31 // pred_check
          %p344 = pneg %p142
        $region42: #{linear_norm_forward.1} parent=31 // pred_check_branch
          %346 = sbr.rel (%p344) target = $region44
        $region43: #{linear_norm_forward.1} parent=31 // pred_region
          %s348 = ssub.s32 128, 128
          %349 = vsyncadd %s340, %s348
          %s350 = sadd.s32 %s27, %s26
          %s351 = smul.addr %s350, 128
          %s352 = scalar_lea.hbm %s3, %s351
          %s354 = sshll.u32 %s343, 4
          %s355 = int_to_ptr.vmem [resolvable:$true] %s354
          %357 = dma.vmem_to_hbm [thread:$0]  %s355, 128, %s352, %s340
        $region44: #{linear_norm_forward.1} parent=31 // pred_fallthru
          _
      $region32: #{linear_norm_forward.1} parent=5 // pred_fallthru
        _
      %p358 = scmp.le.s32.totalorder 2, %s16
      // Predicated region
      $region45: #{linear_norm_forward.1} parent=5 // pred_check
        %p359 = pneg %p358
      $region46: #{linear_norm_forward.1} parent=5 // pred_check_branch
        %361 = sbr.rel (%p359) target = $region48
      $region47: #{linear_norm_forward.1} parent=5 // pred_region
        %s362 = ssub.s32 %s16, 2
        // Predicated region
        $region49: #{linear_norm_forward.1} parent=47 // pred_check
          %p363 = pneg %p148
        $region50: #{linear_norm_forward.1} parent=47 // pred_check_branch
          %365 = sbr.rel (%p363) target = $region52
        $region51: #{linear_norm_forward.1} parent=47 // pred_region
          %s366 = sand.u32 %s133, 1
          %s367 = scalar_lea.sflag [#allocation4], %s366
          %s368 = sand.u32 %s133, 1
          %s369 = smul.addr %s368, 8
          %s370 = scalar_lea.vmem [#allocation7], %s369
          %371 = dma.done %s367, 128
        $region52: #{linear_norm_forward.1} parent=47 // pred_fallthru
          _
      $region48: #{linear_norm_forward.1} parent=5 // pred_fallthru
        _
    $region6: #{linear_norm_forward.1} parent=1 // loop_footer
      %s20 = sadd.s32 1, %s16
    $region7: #{linear_norm_forward.1} parent=1 // loop_footer_branch
      %15 = sbr.rel target = $region3
    $region8: #{linear_norm_forward.1} parent=1 // loop_exit
      _
    %372 = vsyncpa [#allocation3], 1
    %s373 = scalar_lea.sflag [#allocation3], 1
    %374 = vsyncpa %s373, 1
    %375 = vsyncpa [#allocation6], 1
    %376 = vsyncpa [#allocation4], 1
    %s377 = scalar_lea.sflag [#allocation4], 1
    %378 = vsyncpa %s377, 1

</llo_original>
